<compile_context>
chip_gen: v5e
topology: v5e:2x2
jax: 0.10.0
libtpu: 0.0.40
codegen_flags: <defaults>
</compile_context>

<pallas_src>
import jax
import jax.numpy as jnp
from jax.experimental import pallas as pl
from jax.experimental.pallas import tpu as pltpu

NUM_CLASSES = 2


def siamese_kernel(ids1_ref, ids2_ref, table_ref, wp_ref, bp_ref, w1_ref, b1_ref,
                   out_ref):
    """Fused: embedding gather+pool (x2, batched) -> tanh pooler -> add -> fc1 -> softmax.

    ids1_ref, ids2_ref : (TB, S)  int32 token ids of the two titles (this batch tile)
    table_ref          : (V, H)   bf16 embedding table (surrogate encoder input)
    wp_ref             : (H, H)   bf16 pooler weight, pre-scaled by 1/S (mean fold)
    bp_ref             : (1, H)   bf16 pooler bias
    w1_ref             : (H, P)   bf16 fc1 weight, zero-padded from (H, 2) to lane width
    b1_ref             : (1, P)   bf16 fc1 bias, zero-padded
    out_ref            : (TB, P)  f32 lane-dense output; cols [0:2) hold the softmax
    """
    TB, S = ids1_ref.shape
    V, H = table_ref.shape

    # Stack the two inputs along batch so every matmul below runs once on
    # (2*TB, .) instead of twice on (TB, .).
    ids = jnp.concatenate([ids1_ref[...], ids2_ref[...]], axis=0)        # (2TB, S)

    # Fused gather + sequence-sum as a one-hot matmul on the MXU:
    #   counts[b, v] = #occurrences of token v in sequence b
    #   sum_emb      = counts @ emb_table
    iota_v = jax.lax.broadcasted_iota(jnp.int32, (2 * TB, S, V), 2)
    onehot = (ids[:, :, None] == iota_v).astype(jnp.float32)             # (2TB, S, V)
    counts = jnp.sum(onehot, axis=1).astype(jnp.bfloat16)                # (2TB, V)
    sum_emb = jnp.dot(counts, table_ref[...],
                      preferred_element_type=jnp.float32)                # (2TB, H) f32

    # Surrogate CharacterBERT pooler: tanh(mean_emb @ w_pool + b_pool).
    # The 1/S mean scale is folded into wp_ref by the caller, so we feed the
    # raw sequence sum.  bf16 matmul inputs, f32 accumulate, f32 tanh.
    pooled = jnp.tanh(
        jnp.dot(sum_emb.astype(jnp.bfloat16), wp_ref[...],
                preferred_element_type=jnp.float32)
        + bp_ref[...].astype(jnp.float32))                               # (2TB, H)

    # Siamese head: addition -> dropout(0.5, eval identity) -> fc1 (lane-padded).
    addition = (pooled[:TB] + pooled[TB:]).astype(jnp.bfloat16)          # (TB, H)
    logits = (jnp.dot(addition, w1_ref[...],
                      preferred_element_type=jnp.float32)
              + b1_ref[...].astype(jnp.float32))                         # (TB, P)

    # dropout(0.7, eval identity) -> softmax over the 2 real classes only:
    # padded lanes are pushed to a huge negative so they contribute exp(.) = 0.
    col = jax.lax.broadcasted_iota(jnp.int32, logits.shape, 1)
    logits = jnp.where(col < NUM_CLASSES, logits, jnp.float32(-1e30))
    z = logits - jnp.max(logits, axis=1, keepdims=True)
    e = jnp.exp(z)
    probs = e * pl.reciprocal(jnp.sum(e, axis=1, keepdims=True), approx=True)
    out_ref[...] = probs.astype(out_ref.dtype)


def siamese_forward(input1, input2, emb_table, w_pool_scaled, b_pool,
                    w_fc1_pad, b_fc1_pad, *, block_b=8):
    """1-D batch grid; weights are small resident blocks; output is a lane-dense
    (B, P) slab sliced to (B, 2).  Per-step VMEM use (table + wp + w1 + tiles,
    double-buffered) is far below even v7x's 64 MiB budget at these sizes."""
    B, S = input1.shape
    V, H = emb_table.shape
    out_pad = w_fc1_pad.shape[1]
    assert B % block_b == 0, "batch must be divisible by the batch tile"

    out = pl.pallas_call(
        siamese_kernel,
        out_shape=jax.ShapeDtypeStruct((B, out_pad), jnp.float32),
        grid_spec=pltpu.PrefetchScalarGridSpec(
            num_scalar_prefetch=0,
            grid=(B // block_b,),
            in_specs=[
                pl.BlockSpec((block_b, S), lambda i: (i, 0)),      # ids1
                pl.BlockSpec((block_b, S), lambda i: (i, 0)),      # ids2
                pl.BlockSpec((V, H), lambda i: (0, 0)),            # emb table (resident)
                pl.BlockSpec((H, H), lambda i: (0, 0)),            # pooler W (resident)
                pl.BlockSpec((1, H), lambda i: (0, 0)),            # pooler b
                pl.BlockSpec((H, out_pad), lambda i: (0, 0)),      # fc1 W (padded)
                pl.BlockSpec((1, out_pad), lambda i: (0, 0)),      # fc1 b (padded)
            ],
            out_specs=pl.BlockSpec((block_b, out_pad), lambda i: (i, 0)),
        ),
        compiler_params=pltpu.CompilerParams(
            dimension_semantics=("parallel",),   # batch axis -> megacore / 2 TCs on v7x
        ),
    )(input1, input2, emb_table, w_pool_scaled, b_pool, w_fc1_pad, b_fc1_pad)
    return out[:, :NUM_CLASSES]


if __name__ == "__main__":
    # Small shapes consistent with the module's forward (h_size scaled 768 -> 128
    # to stay lane-aligned; vocab and seq kept tiny).
    B, S, H, V = 16, 8, 128, 256
    TB = 8            # batch tile (multiple of 8 sublanes)
    OUT_PAD = 128     # fc1 output padded to one full lane group

    key = jax.random.PRNGKey(0)
    k_emb, k_wp, k_bp, k_w1, k_b1, k_i1, k_i2 = jax.random.split(key, 7)

    # Deterministic synthetic parameters (shapes implied by the module).
    emb_table = 0.02 * jax.random.normal(k_emb, (V, H), jnp.float32)   # surrogate embedding
    w_pool    = 0.50 * jax.random.normal(k_wp, (H, H), jnp.float32)    # surrogate BERT pooler
    b_pool    = 0.02 * jax.random.normal(k_bp, (H,),   jnp.float32)
    w_fc1     = 0.50 * jax.random.normal(k_w1, (H, NUM_CLASSES), jnp.float32)  # nn.Linear(h,2)
    b_fc1     = 0.02 * jax.random.normal(k_b1, (NUM_CLASSES,),   jnp.float32)

    input1 = jax.random.randint(k_i1, (B, S), 0, V, dtype=jnp.int32)
    input2 = jax.random.randint(k_i2, (B, S), 0, V, dtype=jnp.int32)

    # One-time parameter prep ("model weights"): bf16 storage, 1/S mean fold into
    # the pooler weight, lane-dense zero-padding of the fc1 weight/bias.
    table_bf = emb_table.astype(jnp.bfloat16)
    wp_bf    = (w_pool / S).astype(jnp.bfloat16)
    bp_bf    = b_pool.reshape(1, H).astype(jnp.bfloat16)
    w1_bf    = w_fc1.astype(jnp.bfloat16)
    b1_bf    = b_fc1.astype(jnp.bfloat16)
    w1_pad   = jnp.zeros((H, OUT_PAD), jnp.bfloat16).at[:, :NUM_CLASSES].set(w1_bf)
    b1_pad   = jnp.zeros((1, OUT_PAD), jnp.bfloat16).at[0, :NUM_CLASSES].set(b1_bf)

    probs = siamese_forward(input1, input2, table_bf, wp_bf, bp_bf, w1_pad, b1_pad,
                            block_b=TB)
    probs = jax.block_until_ready(probs)

    # Pure-JAX reference (same bf16-rounded parameters, f32 math).
    def reference(ids_a, ids_b):
        tab = table_bf.astype(jnp.float32)
        wp  = wp_bf.astype(jnp.float32)          # includes the 1/S fold
        bp  = bp_bf.astype(jnp.float32)
        w1  = w1_bf.astype(jnp.float32)
        b1  = b1_bf.astype(jnp.float32)
        s1 = jnp.sum(tab[ids_a], axis=1)         # (B, H) sequence sum
        s2 = jnp.sum(tab[ids_b], axis=1)
        p1 = jnp.tanh(s1 @ wp + bp)
        p2 = jnp.tanh(s2 @ wp + bp)
        logits = (p1 + p2) @ w1 + b1
        return jax.nn.softmax(logits, axis=1)

    ref = reference(input1, input2)

    assert probs.shape == (B, NUM_CLASSES)
    assert jnp.allclose(probs.sum(axis=1), 1.0, atol=5e-3)
    assert jnp.allclose(probs, ref, atol=2e-2), (probs, ref)

    print("KERNEL_OK")
</pallas_src>

<mosaic_0001>
module attributes {stable_mosaic.version = 11 : i64} {
  func.func @siamese_kernel(%arg0: i32, %arg1: memref<8x8xi32, #tpu.memory_space<vmem>>, %arg2: memref<8x8xi32, #tpu.memory_space<vmem>>, %arg3: memref<256x128xbf16, #tpu.memory_space<vmem>>, %arg4: memref<128x128xbf16, #tpu.memory_space<vmem>>, %arg5: memref<1x128xbf16, #tpu.memory_space<vmem>>, %arg6: memref<128x128xbf16, #tpu.memory_space<vmem>>, %arg7: memref<1x128xbf16, #tpu.memory_space<vmem>>, %arg8: memref<8x128xf32, #tpu.memory_space<vmem>>) attributes {dimension_semantics = [#tpu.dimension_semantics<parallel>], iteration_bounds = array<i64: 2>, scalar_prefetch = 0 : i64, scratch_operands = 0 : i64, tpu.core_type = #tpu.core_type<tc>, window_params = [{transform_indices = @transform_0, window_bounds = array<i64: 8, 8>}, {transform_indices = @transform_1, window_bounds = array<i64: 8, 8>}, {pipeline_mode = #tpu.pipeline_mode<synchronous>, transform_indices = @transform_2, window_bounds = array<i64: 256, 128>}, {pipeline_mode = #tpu.pipeline_mode<synchronous>, transform_indices = @transform_3, window_bounds = array<i64: 128, 128>}, {pipeline_mode = #tpu.pipeline_mode<synchronous>, transform_indices = @transform_4, window_bounds = array<i64: 1, 128>}, {pipeline_mode = #tpu.pipeline_mode<synchronous>, transform_indices = @transform_5, window_bounds = array<i64: 128, 128>}, {pipeline_mode = #tpu.pipeline_mode<synchronous>, transform_indices = @transform_6, window_bounds = array<i64: 1, 128>}, {transform_indices = @transform_7, window_bounds = array<i64: 8, 128>}]} {
    %c0 = arith.constant 0 : index
    %c0_0 = arith.constant 0 : index
    %0 = vector.load %arg1[%c0, %c0_0] : memref<8x8xi32, #tpu.memory_space<vmem>>, vector<8x8xi32>
    %c0_1 = arith.constant 0 : index
    %c0_2 = arith.constant 0 : index
    %1 = vector.load %arg2[%c0_1, %c0_2] : memref<8x8xi32, #tpu.memory_space<vmem>>, vector<8x8xi32>
    %2 = tpu.concatenate %0, %1 in 0 : vector<8x8xi32>, vector<8x8xi32> -> vector<16x8xi32>
    %3 = tpu.iota {dimensions = array<i32: 2>} : vector<16x8x256xi32>
    %4 = vector.shape_cast %2 : vector<16x8xi32> to vector<16x8x1xi32>
    %5 = vector.broadcast %4 : vector<16x8x1xi32> to vector<16x8x256xi32>
    %6 = arith.cmpi eq, %5, %3 : vector<16x8x256xi32>
    %7 = arith.extui %6 : vector<16x8x256xi1> to vector<16x8x256xi32>
    %8 = arith.sitofp %7 : vector<16x8x256xi32> to vector<16x8x256xf32>
    %cst = arith.constant dense<0.000000e+00> : vector<16x256xf32>
    %9 = vector.multi_reduction <add>, %8, %cst [1] : vector<16x8x256xf32> to vector<16x256xf32>
    %10 = arith.truncf %9 : vector<16x256xf32> to vector<16x256xbf16>
    %c0_3 = arith.constant 0 : index
    %c0_4 = arith.constant 0 : index
    %11 = vector.load %arg3[%c0_3, %c0_4] : memref<256x128xbf16, #tpu.memory_space<vmem>>, vector<256x128xbf16>
    %cst_5 = arith.constant dense<0.000000e+00> : vector<16x128xf32>
    %12 = tpu.matmul %10, %11, %cst_5 {dimension_numbers = #tpu.dot_dimension_numbers<[1], [0], [0], [1], [0, 0, 1, 1], [], []>} : vector<16x256xbf16>, vector<256x128xbf16>, vector<16x128xf32> -> vector<16x128xf32>
    %13 = arith.truncf %12 : vector<16x128xf32> to vector<16x128xbf16>
    %c0_6 = arith.constant 0 : index
    %c0_7 = arith.constant 0 : index
    %14 = vector.load %arg4[%c0_6, %c0_7] : memref<128x128xbf16, #tpu.memory_space<vmem>>, vector<128x128xbf16>
    %cst_8 = arith.constant dense<0.000000e+00> : vector<16x128xf32>
    %15 = tpu.matmul %13, %14, %cst_8 {dimension_numbers = #tpu.dot_dimension_numbers<[1], [0], [0], [1], [0, 0, 1, 1], [], []>} : vector<16x128xbf16>, vector<128x128xbf16>, vector<16x128xf32> -> vector<16x128xf32>
    %c0_9 = arith.constant 0 : index
    %c0_10 = arith.constant 0 : index
    %16 = vector.load %arg5[%c0_9, %c0_10] : memref<1x128xbf16, #tpu.memory_space<vmem>>, vector<1x128xbf16>
    %17 = arith.extf %16 : vector<1x128xbf16> to vector<1x128xf32>
    %18 = vector.broadcast %17 : vector<1x128xf32> to vector<16x128xf32>
    %19 = arith.addf %15, %18 : vector<16x128xf32>
    %20 = math.tanh %19 : vector<16x128xf32>
    %21 = vector.extract_strided_slice %20 {offsets = [0, 0], sizes = [8, 128], strides = [1, 1]} : vector<16x128xf32> to vector<8x128xf32>
    %22 = vector.extract_strided_slice %20 {offsets = [8, 0], sizes = [8, 128], strides = [1, 1]} : vector<16x128xf32> to vector<8x128xf32>
    %23 = arith.addf %21, %22 : vector<8x128xf32>
    %24 = arith.truncf %23 : vector<8x128xf32> to vector<8x128xbf16>
    %c0_11 = arith.constant 0 : index
    %c0_12 = arith.constant 0 : index
    %25 = vector.load %arg6[%c0_11, %c0_12] : memref<128x128xbf16, #tpu.memory_space<vmem>>, vector<128x128xbf16>
    %cst_13 = arith.constant dense<0.000000e+00> : vector<8x128xf32>
    %26 = tpu.matmul %24, %25, %cst_13 {dimension_numbers = #tpu.dot_dimension_numbers<[1], [0], [0], [1], [0, 0, 1, 1], [], []>} : vector<8x128xbf16>, vector<128x128xbf16>, vector<8x128xf32> -> vector<8x128xf32>
    %c0_14 = arith.constant 0 : index
    %c0_15 = arith.constant 0 : index
    %27 = vector.load %arg7[%c0_14, %c0_15] : memref<1x128xbf16, #tpu.memory_space<vmem>>, vector<1x128xbf16>
    %28 = arith.extf %27 : vector<1x128xbf16> to vector<1x128xf32>
    %29 = vector.broadcast %28 : vector<1x128xf32> to vector<8x128xf32>
    %30 = arith.addf %26, %29 : vector<8x128xf32>
    %31 = tpu.iota {dimensions = array<i32: 1>} : vector<8x128xi32>
    %c2_i32 = arith.constant 2 : i32
    %32 = vector.broadcast %c2_i32 : i32 to vector<8x128xi32>
    %33 = arith.cmpi slt, %31, %32 : vector<8x128xi32>
    %cst_16 = arith.constant -1.000000e+30 : f32
    %34 = vector.broadcast %cst_16 : f32 to vector<8x128xf32>
    %35 = arith.select %33, %30, %34 : vector<8x128xi1>, vector<8x128xf32>
    %cst_17 = arith.constant dense<0xFF800000> : vector<8xf32>
    %36 = vector.multi_reduction <maximumf>, %35, %cst_17 [1] : vector<8x128xf32> to vector<8xf32>
    %37 = vector.shape_cast %36 : vector<8xf32> to vector<8x1xf32>
    %38 = vector.broadcast %37 : vector<8x1xf32> to vector<8x128xf32>
    %39 = arith.subf %35, %38 : vector<8x128xf32>
    %40 = math.exp %39 : vector<8x128xf32>
    %cst_18 = arith.constant dense<0.000000e+00> : vector<8xf32>
    %41 = vector.multi_reduction <add>, %40, %cst_18 [1] : vector<8x128xf32> to vector<8xf32>
    %42 = vector.shape_cast %41 : vector<8xf32> to vector<8x1xf32>
    %43 = tpu.reciprocal %42 {approx = true} : vector<8x1xf32> -> vector<8x1xf32>
    %44 = vector.broadcast %43 : vector<8x1xf32> to vector<8x128xf32>
    %45 = arith.mulf %40, %44 : vector<8x128xf32>
    %c0_19 = arith.constant 0 : index
    %c0_20 = arith.constant 0 : index
    %46 = vector.load %arg8[%c0_19, %c0_20] : memref<8x128xf32, #tpu.memory_space<vmem>>, vector<8x128xf32>
    tpu.vector_store %arg8[%c0_19, %c0_20], %45 {strides = array<i32>} : memref<8x128xf32, #tpu.memory_space<vmem>>, vector<8x128xf32>,
    return
  }
  func.func @transform_0(%arg0: i32) -> (i32, i32) {
    %c0_i32 = arith.constant 0 : i32
    %c0_i32_0 = arith.constant 0 : i32
    return %arg0, %c0_i32 : i32, i32
  }
  func.func @transform_1(%arg0: i32) -> (i32, i32) {
    %c0_i32 = arith.constant 0 : i32
    %c0_i32_0 = arith.constant 0 : i32
    return %arg0, %c0_i32 : i32, i32
  }
  func.func @transform_2(%arg0: i32) -> (i32, i32) {
    %c0_i32 = arith.constant 0 : i32
    %c0_i32_0 = arith.constant 0 : i32
    %c0_i32_1 = arith.constant 0 : i32
    return %c0_i32, %c0_i32_0 : i32, i32
  }
  func.func @transform_3(%arg0: i32) -> (i32, i32) {
    %c0_i32 = arith.constant 0 : i32
    %c0_i32_0 = arith.constant 0 : i32
    %c0_i32_1 = arith.constant 0 : i32
    return %c0_i32, %c0_i32_0 : i32, i32
  }
  func.func @transform_4(%arg0: i32) -> (i32, i32) {
    %c0_i32 = arith.constant 0 : i32
    %c0_i32_0 = arith.constant 0 : i32
    %c0_i32_1 = arith.constant 0 : i32
    return %c0_i32, %c0_i32_0 : i32, i32
  }
  func.func @transform_5(%arg0: i32) -> (i32, i32) {
    %c0_i32 = arith.constant 0 : i32
    %c0_i32_0 = arith.constant 0 : i32
    %c0_i32_1 = arith.constant 0 : i32
    return %c0_i32, %c0_i32_0 : i32, i32
  }
  func.func @transform_6(%arg0: i32) -> (i32, i32) {
    %c0_i32 = arith.constant 0 : i32
    %c0_i32_0 = arith.constant 0 : i32
    %c0_i32_1 = arith.constant 0 : i32
    return %c0_i32, %c0_i32_0 : i32, i32
  }
  func.func @transform_7(%arg0: i32) -> (i32, i32) {
    %c0_i32 = arith.constant 0 : i32
    %c0_i32_0 = arith.constant 0 : i32
    return %arg0, %c0_i32 : i32, i32
  }
}

</mosaic_0001>

<llo_original>
// kernel: tpu_custom_call.1
$region0: #{tpu_custom_call.1}
  #allocation0 [shape = 'u32[]', space=smem, size = 0x4, offset = 0x4, fixed_abs, tag = 'smem constant byte address 0x4 - core index']
  #allocation1 [shape = 'u32[72,128]{1,0:T(1,128)}', space=vmem, size = 0x9000, scoped, tag = 'internal scratch']
  %s0 = inlined_call_operand.vmem [shape: s32[16,8], index: 0, kind: input, shape index: {}]
  %s1 = inlined_call_operand.vmem [shape: s32[16,8], index: 1, kind: input, shape index: {}]
  %s2 = inlined_call_operand.hbm [shape: bf16[256,128], index: 2, kind: input, shape index: {}]
  %s3 = inlined_call_operand.hbm [shape: bf16[128,128], index: 3, kind: input, shape index: {}]
  %s4 = inlined_call_operand.vmem [shape: bf16[1,128], index: 4, kind: input, shape index: {}]
  %s5 = inlined_call_operand.hbm [shape: bf16[128,128], index: 5, kind: input, shape index: {}]
  %s6 = inlined_call_operand.vmem [shape: bf16[1,128], index: 6, kind: input, shape index: {}]
  %s7 = inlined_call_operand.hbm [shape: f32[16,128], index: 7, kind: output, shape index: {}]
  %s8 = sld [smem:[#allocation0]]
  $region73: #{tpu_custom_call.1} parent=0
    _
  %s10 = ssub.s32 1, %s8
  %s11 = scalar_select 0, %s10, %s8
  $region1: #{tpu_custom_call.1} parent=0
    #allocation2 [shape = 'u8[65536]{0}', space=vmem, size = 0x10000, scoped, tag = 'input window, operand 2, single buffered']
    #allocation3 [shape = 's32[2]{0}', space=sflag, size = 0x8, scoped, tag = 'scoped memory for tpu_custom_call.1']
    #allocation4 [shape = 's32[2]{0}', space=sflag, size = 0x8, scoped, tag = 'scoped memory for tpu_custom_call.1']
    #allocation5 [shape = 'u8[32768]{0}', space=vmem, size = 0x8000, scoped, tag = 'input window, operand 3, single buffered']
    #allocation6 [shape = 's32[1]{0}', space=sflag, size = 0x4, scoped, tag = 'scoped memory for tpu_custom_call.1']
    #allocation7 [shape = 'u8[32768]{0}', space=vmem, size = 0x8000, scoped, tag = 'input window, operand 5, single buffered']
    #allocation8 [shape = 'u8[8192]{0}', space=vmem, size = 0x2000, scoped, tag = 'output window, operand 0']
    %12 = vsyncpa [#allocation3], 0
    %13 = vsyncpa [#allocation6], 0
    %14 = vsyncpa [#allocation4], 0
    %s15 = scalar_lea.sflag [#allocation4], 1
    %16 = vsyncpa %s15, 0
    loop: start=0, step=1, limit=4
    $region2: #{tpu_custom_call.1} parent=1 // loop_pre_header
      _
    $region3: #{tpu_custom_call.1} parent=1 // loop_header
      %s18 = sphi 0, %s22
      %p19 = scmp.ge.s32.totalorder %s18, 4
      %s28 = sphi 0, %s30
      %s31 = sphi 0, %s28
      %s32 = sphi 0, %s31
      %s48 = sphi 0, %s32
      %s54 = sphi 0, %s56
      %s57 = sphi 0, %s54
      %s58 = sphi 0, %s57
      %s74 = sphi 0, %s58
      %s78 = sphi 0, %s78
      %s80 = sphi 0, %s78
      %s81 = sphi 0, %s80
      %s95 = sphi 0, %s81
      %s99 = sphi 0, %s99
      %s101 = sphi 0, %s99
      %s102 = sphi 0, %s101
      %s116 = sphi 0, %s102
      %s120 = sphi 0, %s120
      %s122 = sphi 0, %s120
      %s123 = sphi 0, %s122
      %s137 = sphi 0, %s123
      %s141 = sphi 0, %s141
      %s143 = sphi 0, %s141
      %s144 = sphi 0, %s143
      %s158 = sphi 0, %s144
      %s162 = sphi 0, %s162
      %s164 = sphi 0, %s162
      %s165 = sphi 0, %s164
      %s179 = sphi 0, %s165
      %s185 = sphi 0, %s187
      %s188 = sphi 0, %s185
      %s189 = sphi 0, %s188
      %s205 = sphi 0, %s189
    $region4: #{tpu_custom_call.1} parent=1 // loop_header_branch
      %21 = sbr.rel (%p19) target = $region8
    $region5: #{tpu_custom_call.1} parent=1 // loop_body
      %s23 = ssub.s32 %s18, 1
      %s24 = ssub.s32 %s18, 2
      %s25 = sadd.s32 %s18, 1
      %s26 = ssub.s32 %s18, %s25
      %p27 = scmp.eq.s32.totalorder %s26, 0
      %s29 = sadd.s32 %s28, 1
      %s30 = scalar_select %p27, %s28, %s29
      %p33 = pneg %p27
      %p34 = scmp.eq.s32.totalorder %s18, 1
      %p35 = por %p33, %p34
      %p36 = scmp.ne.s32.totalorder %s28, %s31
      %p37 = scmp.eq.s32.totalorder %s18, 0
      %p38 = por %p36, %p37
      %p39 = scmp.ne.s32.totalorder %s28, %s31
      %p40 = scmp.eq.s32.totalorder %s23, 1
      %p41 = por %p39, %p40
      %p42 = scmp.ne.s32.totalorder %s31, %s32
      %p43 = scmp.eq.s32.totalorder %s23, 0
      %p44 = por %p42, %p43
      %p45 = scmp.ne.s32.totalorder %s31, %s32
      %p46 = scmp.eq.s32.totalorder %s24, 1
      %p47 = por %p45, %p46
      %p49 = scmp.ne.s32.totalorder %s32, %s48
      %p50 = scmp.eq.s32.totalorder %s24, 0
      %p51 = por %p49, %p50
      %s52 = ssub.s32 %s18, %s25
      %p53 = scmp.eq.s32.totalorder %s52, 0
      %s55 = sadd.s32 %s54, 1
      %s56 = scalar_select %p53, %s54, %s55
      %p59 = pneg %p53
      %p60 = scmp.eq.s32.totalorder %s18, 1
      %p61 = por %p59, %p60
      %p62 = scmp.ne.s32.totalorder %s54, %s57
      %p63 = scmp.eq.s32.totalorder %s18, 0
      %p64 = por %p62, %p63
      %p65 = scmp.ne.s32.totalorder %s54, %s57
      %p66 = scmp.eq.s32.totalorder %s23, 1
      %p67 = por %p65, %p66
      %p68 = scmp.ne.s32.totalorder %s57, %s58
      %p69 = scmp.eq.s32.totalorder %s23, 0
      %p70 = por %p68, %p69
      %p71 = scmp.ne.s32.totalorder %s57, %s58
      %p72 = scmp.eq.s32.totalorder %s24, 1
      %p73 = por %p71, %p72
      %p75 = scmp.ne.s32.totalorder %s58, %s74
      %p76 = scmp.eq.s32.totalorder %s24, 0
      %p77 = por %p75, %p76
      %s79 = sadd.s32 %s78, 1
      %p82 = scmp.eq.s32.totalorder %s18, 1
      %p83 = scmp.ne.s32.totalorder %s78, %s80
      %p84 = scmp.eq.s32.totalorder %s18, 0
      %p85 = por %p83, %p84
      %p86 = scmp.ne.s32.totalorder %s78, %s80
      %p87 = scmp.eq.s32.totalorder %s23, 1
      %p88 = por %p86, %p87
      %p89 = scmp.ne.s32.totalorder %s80, %s81
      %p90 = scmp.eq.s32.totalorder %s23, 0
      %p91 = por %p89, %p90
      %p92 = scmp.ne.s32.totalorder %s80, %s81
      %p93 = scmp.eq.s32.totalorder %s24, 1
      %p94 = por %p92, %p93
      %p96 = scmp.ne.s32.totalorder %s81, %s95
      %p97 = scmp.eq.s32.totalorder %s24, 0
      %p98 = por %p96, %p97
      %s100 = sadd.s32 %s99, 1
      %p103 = scmp.eq.s32.totalorder %s18, 1
      %p104 = scmp.ne.s32.totalorder %s99, %s101
      %p105 = scmp.eq.s32.totalorder %s18, 0
      %p106 = por %p104, %p105
      %p107 = scmp.ne.s32.totalorder %s99, %s101
      %p108 = scmp.eq.s32.totalorder %s23, 1
      %p109 = por %p107, %p108
      %p110 = scmp.ne.s32.totalorder %s101, %s102
      %p111 = scmp.eq.s32.totalorder %s23, 0
      %p112 = por %p110, %p111
      %p113 = scmp.ne.s32.totalorder %s101, %s102
      %p114 = scmp.eq.s32.totalorder %s24, 1
      %p115 = por %p113, %p114
      %p117 = scmp.ne.s32.totalorder %s102, %s116
      %p118 = scmp.eq.s32.totalorder %s24, 0
      %p119 = por %p117, %p118
      %s121 = sadd.s32 %s120, 1
      %p124 = scmp.eq.s32.totalorder %s18, 1
      %p125 = scmp.ne.s32.totalorder %s120, %s122
      %p126 = scmp.eq.s32.totalorder %s18, 0
      %p127 = por %p125, %p126
      %p128 = scmp.ne.s32.totalorder %s120, %s122
      %p129 = scmp.eq.s32.totalorder %s23, 1
      %p130 = por %p128, %p129
      %p131 = scmp.ne.s32.totalorder %s122, %s123
      %p132 = scmp.eq.s32.totalorder %s23, 0
      %p133 = por %p131, %p132
      %p134 = scmp.ne.s32.totalorder %s122, %s123
      %p135 = scmp.eq.s32.totalorder %s24, 1
      %p136 = por %p134, %p135
      %p138 = scmp.ne.s32.totalorder %s123, %s137
      %p139 = scmp.eq.s32.totalorder %s24, 0
      %p140 = por %p138, %p139
      %s142 = sadd.s32 %s141, 1
      %p145 = scmp.eq.s32.totalorder %s18, 1
      %p146 = scmp.ne.s32.totalorder %s141, %s143
      %p147 = scmp.eq.s32.totalorder %s18, 0
      %p148 = por %p146, %p147
      %p149 = scmp.ne.s32.totalorder %s141, %s143
      %p150 = scmp.eq.s32.totalorder %s23, 1
      %p151 = por %p149, %p150
      %p152 = scmp.ne.s32.totalorder %s143, %s144
      %p153 = scmp.eq.s32.totalorder %s23, 0
      %p154 = por %p152, %p153
      %p155 = scmp.ne.s32.totalorder %s143, %s144
      %p156 = scmp.eq.s32.totalorder %s24, 1
      %p157 = por %p155, %p156
      %p159 = scmp.ne.s32.totalorder %s144, %s158
      %p160 = scmp.eq.s32.totalorder %s24, 0
      %p161 = por %p159, %p160
      %s163 = sadd.s32 %s162, 1
      %p166 = scmp.eq.s32.totalorder %s18, 1
      %p167 = scmp.ne.s32.totalorder %s162, %s164
      %p168 = scmp.eq.s32.totalorder %s18, 0
      %p169 = por %p167, %p168
      %p170 = scmp.ne.s32.totalorder %s162, %s164
      %p171 = scmp.eq.s32.totalorder %s23, 1
      %p172 = por %p170, %p171
      %p173 = scmp.ne.s32.totalorder %s164, %s165
      %p174 = scmp.eq.s32.totalorder %s23, 0
      %p175 = por %p173, %p174
      %p176 = scmp.ne.s32.totalorder %s164, %s165
      %p177 = scmp.eq.s32.totalorder %s24, 1
      %p178 = por %p176, %p177
      %p180 = scmp.ne.s32.totalorder %s165, %s179
      %p181 = scmp.eq.s32.totalorder %s24, 0
      %p182 = por %p180, %p181
      %s183 = ssub.s32 %s18, %s25
      %p184 = scmp.eq.s32.totalorder %s183, 0
      %s186 = sadd.s32 %s185, 1
      %s187 = scalar_select %p184, %s185, %s186
      %p190 = pneg %p184
      %p191 = scmp.eq.s32.totalorder %s18, 1
      %p192 = por %p190, %p191
      %p193 = scmp.ne.s32.totalorder %s185, %s188
      %p194 = scmp.eq.s32.totalorder %s18, 0
      %p195 = por %p193, %p194
      %p196 = scmp.ne.s32.totalorder %s185, %s188
      %p197 = scmp.eq.s32.totalorder %s23, 1
      %p198 = por %p196, %p197
      %p199 = scmp.ne.s32.totalorder %s188, %s189
      %p200 = scmp.eq.s32.totalorder %s23, 0
      %p201 = por %p199, %p200
      %p202 = scmp.ne.s32.totalorder %s188, %s189
      %p203 = scmp.eq.s32.totalorder %s24, 1
      %p204 = por %p202, %p203
      %p206 = scmp.ne.s32.totalorder %s189, %s205
      %p207 = scmp.eq.s32.totalorder %s24, 0
      %p208 = por %p206, %p207
      %p209 = scmp.le.s32.totalorder 1, %s18
      %p210 = scmp.lt.s32.totalorder %s18, 3
      %p211 = pnand %p209, %p210
      %p212 = pneg %p211
      // Predicated region
      $region9: #{tpu_custom_call.1} parent=5 // pred_check
        _
      $region10: #{tpu_custom_call.1} parent=5 // pred_check_branch
        %214 = sbr.rel (%p211) target = $region12
      $region11: #{tpu_custom_call.1} parent=5 // pred_region
        %s215 = ssub.s32 %s18, 1
        // Predicated region
        $region13: #{tpu_custom_call.1} parent=11 // pred_check
          %p216 = pneg %p91
        $region14: #{tpu_custom_call.1} parent=11 // pred_check_branch
          %218 = sbr.rel (%p216) target = $region16
        $region15: #{tpu_custom_call.1} parent=11 // pred_region
          %220 = vsyncadd [#allocation3], 0
          %s221 = sshll.u32 %s2, 4
          %s222 = int_to_ptr.hbm [resolvable:$true] %s221
          %s223 = sshll.u32 [#allocation2], 4
          %s224 = int_to_ptr.vmem [resolvable:$true] %s223
          %229 = dma.hbm_to_vmem [thread:$0]  %s222, 2048, %s224, [#allocation3], 64, 64, 4
        $region16: #{tpu_custom_call.1} parent=11 // pred_fallthru
          _
        // Predicated region
        $region17: #{tpu_custom_call.1} parent=11 // pred_check
          %p230 = pneg %p112
        $region18: #{tpu_custom_call.1} parent=11 // pred_check_branch
          %232 = sbr.rel (%p230) target = $region20
        $region19: #{tpu_custom_call.1} parent=11 // pred_region
          %234 = vsyncadd [#allocation6], 0
          %s235 = sshll.u32 %s3, 4
          %s236 = int_to_ptr.hbm [resolvable:$true] %s235
          %s237 = sshll.u32 [#allocation5], 4
          %s238 = int_to_ptr.vmem [resolvable:$true] %s237
          %243 = dma.hbm_to_vmem [thread:$0]  %s236, 1024, %s238, [#allocation6], 64, 64, 4
        $region20: #{tpu_custom_call.1} parent=11 // pred_fallthru
          _
        // Predicated region
        $region21: #{tpu_custom_call.1} parent=11 // pred_check
          %p244 = pneg %p133
        $region22: #{tpu_custom_call.1} parent=11 // pred_check_branch
          %246 = sbr.rel (%p244) target = $region24
        $region23: #{tpu_custom_call.1} parent=11 // pred_region
          _
        $region24: #{tpu_custom_call.1} parent=11 // pred_fallthru
          _
        // Predicated region
        $region25: #{tpu_custom_call.1} parent=11 // pred_check
          %p247 = pneg %p154
        $region26: #{tpu_custom_call.1} parent=11 // pred_check_branch
          %249 = sbr.rel (%p247) target = $region28
        $region27: #{tpu_custom_call.1} parent=11 // pred_region
          %251 = vsyncadd [#allocation6], 0
          %s252 = sshll.u32 %s5, 4
          %s253 = int_to_ptr.hbm [resolvable:$true] %s252
          %s254 = sshll.u32 [#allocation7], 4
          %s255 = int_to_ptr.vmem [resolvable:$true] %s254
          %260 = dma.hbm_to_vmem [thread:$0]  %s253, 1024, %s255, [#allocation6], 64, 64, 4
        $region28: #{tpu_custom_call.1} parent=11 // pred_fallthru
          _
        // Predicated region
        $region29: #{tpu_custom_call.1} parent=11 // pred_check
          %p261 = pneg %p175
        $region30: #{tpu_custom_call.1} parent=11 // pred_check_branch
          %263 = sbr.rel (%p261) target = $region32
        $region31: #{tpu_custom_call.1} parent=11 // pred_region
          _
        $region32: #{tpu_custom_call.1} parent=11 // pred_fallthru
          _
      $region12: #{tpu_custom_call.1} parent=5 // pred_fallthru
        _
      %p264 = scmp.lt.s32.totalorder %s18, 2
      // Predicated region
      $region33: #{tpu_custom_call.1} parent=5 // pred_check
        %p265 = pneg %p264
      $region34: #{tpu_custom_call.1} parent=5 // pred_check_branch
        %267 = sbr.rel (%p265) target = $region36
      $region35: #{tpu_custom_call.1} parent=5 // pred_region
        // Predicated region
        $region37: #{tpu_custom_call.1} parent=35 // pred_check
          %p268 = pneg %p38
        $region38: #{tpu_custom_call.1} parent=35 // pred_check_branch
          %270 = sbr.rel (%p268) target = $region40
        $region39: #{tpu_custom_call.1} parent=35 // pred_region
          %p271 = scmp.lt.s32.totalorder %s18, 1
          %s272 = scalar_select %p271, %s18, 1
          %s273 = smul.addr %s272, 8
          %s274 = scalar_lea.vmem %s0, %s273
        $region40: #{tpu_custom_call.1} parent=35 // pred_fallthru
          _
        // Predicated region
        $region41: #{tpu_custom_call.1} parent=35 // pred_check
          %p275 = pneg %p64
        $region42: #{tpu_custom_call.1} parent=35 // pred_check_branch
          %277 = sbr.rel (%p275) target = $region44
        $region43: #{tpu_custom_call.1} parent=35 // pred_region
          %p278 = scmp.lt.s32.totalorder %s18, 1
          %s279 = scalar_select %p278, %s18, 1
          %s280 = smul.addr %s279, 8
          %s281 = scalar_lea.vmem %s1, %s280
        $region44: #{tpu_custom_call.1} parent=35 // pred_fallthru
          _
      $region36: #{tpu_custom_call.1} parent=5 // pred_fallthru
        _
      %p282 = scmp.le.s32.totalorder 1, %s18
      %p283 = scmp.lt.s32.totalorder %s18, 3
      %p284 = pnand %p282, %p283
      %p285 = pneg %p284
      // Predicated region
      $region45: #{tpu_custom_call.1} parent=5 // pred_check
        _
      $region46: #{tpu_custom_call.1} parent=5 // pred_check_branch
        %287 = sbr.rel (%p284) target = $region48
      $region47: #{tpu_custom_call.1} parent=5 // pred_region
        %s288 = ssub.s32 %s18, 1
        // Predicated region
        $region49: #{tpu_custom_call.1} parent=47 // pred_check
          %p289 = pneg %p91
        $region50: #{tpu_custom_call.1} parent=47 // pred_check_branch
          %291 = sbr.rel (%p289) target = $region52
        $region51: #{tpu_custom_call.1} parent=47 // pred_region
          %293 = dma.done [#allocation3], 2048
        $region52: #{tpu_custom_call.1} parent=47 // pred_fallthru
          _
        // Predicated region
        $region53: #{tpu_custom_call.1} parent=47 // pred_check
          %p294 = pneg %p112
        $region54: #{tpu_custom_call.1} parent=47 // pred_check_branch
          %296 = sbr.rel (%p294) target = $region56
        $region55: #{tpu_custom_call.1} parent=47 // pred_region
          %298 = dma.done [#allocation6], 1024
        $region56: #{tpu_custom_call.1} parent=47 // pred_fallthru
          _
        // Predicated region
        $region57: #{tpu_custom_call.1} parent=47 // pred_check
          %p299 = pneg %p154
        $region58: #{tpu_custom_call.1} parent=47 // pred_check_branch
          %301 = sbr.rel (%p299) target = $region60
        $region59: #{tpu_custom_call.1} parent=47 // pred_region
          %303 = dma.done [#allocation6], 1024
        $region60: #{tpu_custom_call.1} parent=47 // pred_fallthru
          _
        %p304 = scmp.lt.s32.totalorder %s23, 1
        %s305 = scalar_select %p304, %s23, 1
        %s306 = smul.addr %s305, 8
        %s307 = scalar_lea.vmem %s0, %s306
        %p308 = pneg %p44
        %p309 = pneg %p41
        %p310 = scmp.lt.s32.totalorder %s23, 1
        %s311 = scalar_select %p310, %s23, 1
        %s312 = smul.addr %s311, 8
        %s313 = scalar_lea.vmem %s1, %s312
        %p314 = pneg %p70
        %p315 = pneg %p67
        %p316 = pneg %p91
        %p317 = pneg %p88
        %p318 = pneg %p112
        %p319 = pneg %p109
        %p320 = pneg %p133
        %p321 = pneg %p130
        %p322 = pneg %p154
        %p323 = pneg %p151
        %p324 = pneg %p175
        %p325 = pneg %p172
        %p326 = pneg %p201
        %p327 = pneg %p198
        %s328 = sand.u32 %s188, 1
        %s329 = scalar_lea.sflag [#allocation4], %s328
        %s330 = sand.u32 %s188, 1
        %s331 = smul.addr %s330, 8
        %s332 = scalar_lea.vmem [#allocation8], %s331
        %p333 = scmp.lt.s32.totalorder %s23, 1
        %s334 = scalar_select %p333, %s23, 1
        %s335 = smul.addr %s334, 8
        %s336 = scalar_lea.vmem %s0, %s335
        %p337 = scmp.lt.s32.totalorder %s23, 1
        %s338 = scalar_select %p337, %s23, 1
        %s339 = smul.addr %s338, 8
        %s340 = scalar_lea.vmem %s1, %s339
        %v341 = vld [vmem:[%s336] sm:$0xff]
        %v342 = vld [vmem:[%s340] sm:$0xff]
        %v343 = vlaneseq
        %v344 = vand.u32 %v343, 127
        %v345 = vadd.s32 %v344, 128
        %v346 = vperm.slane %v341, 0
        %v347 = vlaneseq
        %v348 = vshrl.u32 %v347, 7
        %350 = vset.pattern.permute.xlu0 %v348
        %351 = vperm.xlu0 %350, %v346
        %v352 = vpop.permute.xlu0 %351
        %v353 = vperm.slane %v341, 1
        %v354 = vlaneseq
        %v355 = vshrl.u32 %v354, 7
        %357 = vset.pattern.permute.xlu0 %v355
        %358 = vperm.xlu0 %357, %v353
        %v359 = vpop.permute.xlu0 %358
        %v360 = vperm.slane %v341, 2
        %v361 = vlaneseq
        %v362 = vshrl.u32 %v361, 7
        %364 = vset.pattern.permute.xlu0 %v362
        %365 = vperm.xlu0 %364, %v360
        %v366 = vpop.permute.xlu0 %365
        %v367 = vperm.slane %v341, 3
        %v368 = vlaneseq
        %v369 = vshrl.u32 %v368, 7
        %371 = vset.pattern.permute.xlu0 %v369
        %372 = vperm.xlu0 %371, %v367
        %v373 = vpop.permute.xlu0 %372
        %v374 = vperm.slane %v341, 4
        %v375 = vlaneseq
        %v376 = vshrl.u32 %v375, 7
        %378 = vset.pattern.permute.xlu0 %v376
        %379 = vperm.xlu0 %378, %v374
        %v380 = vpop.permute.xlu0 %379
        %v381 = vperm.slane %v341, 5
        %v382 = vlaneseq
        %v383 = vshrl.u32 %v382, 7
        %385 = vset.pattern.permute.xlu0 %v383
        %386 = vperm.xlu0 %385, %v381
        %v387 = vpop.permute.xlu0 %386
        %v388 = vperm.slane %v341, 6
        %v389 = vlaneseq
        %v390 = vshrl.u32 %v389, 7
        %392 = vset.pattern.permute.xlu0 %v390
        %393 = vperm.xlu0 %392, %v388
        %v394 = vpop.permute.xlu0 %393
        %v395 = vperm.slane %v341, 7
        %v396 = vlaneseq
        %v397 = vshrl.u32 %v396, 7
        %399 = vset.pattern.permute.xlu0 %v397
        %400 = vperm.xlu0 %399, %v395
        %v401 = vpop.permute.xlu0 %400
        %v402 = vperm.slane %v342, 0
        %v403 = vlaneseq
        %v404 = vshrl.u32 %v403, 7
        %406 = vset.pattern.permute.xlu0 %v404
        %407 = vperm.xlu0 %406, %v402
        %v408 = vpop.permute.xlu0 %407
        %v409 = vperm.slane %v342, 1
        %v410 = vlaneseq
        %v411 = vshrl.u32 %v410, 7
        %413 = vset.pattern.permute.xlu0 %v411
        %414 = vperm.xlu0 %413, %v409
        %v415 = vpop.permute.xlu0 %414
        %v416 = vperm.slane %v342, 2
        %v417 = vlaneseq
        %v418 = vshrl.u32 %v417, 7
        %420 = vset.pattern.permute.xlu0 %v418
        %421 = vperm.xlu0 %420, %v416
        %v422 = vpop.permute.xlu0 %421
        %v423 = vperm.slane %v342, 3
        %v424 = vlaneseq
        %v425 = vshrl.u32 %v424, 7
        %427 = vset.pattern.permute.xlu0 %v425
        %428 = vperm.xlu0 %427, %v423
        %v429 = vpop.permute.xlu0 %428
        %v430 = vperm.slane %v342, 4
        %v431 = vlaneseq
        %v432 = vshrl.u32 %v431, 7
        %434 = vset.pattern.permute.xlu0 %v432
        %435 = vperm.xlu0 %434, %v430
        %v436 = vpop.permute.xlu0 %435
        %v437 = vperm.slane %v342, 5
        %v438 = vlaneseq
        %v439 = vshrl.u32 %v438, 7
        %441 = vset.pattern.permute.xlu0 %v439
        %442 = vperm.xlu0 %441, %v437
        %v443 = vpop.permute.xlu0 %442
        %v444 = vperm.slane %v342, 6
        %v445 = vlaneseq
        %v446 = vshrl.u32 %v445, 7
        %448 = vset.pattern.permute.xlu0 %v446
        %449 = vperm.xlu0 %448, %v444
        %v450 = vpop.permute.xlu0 %449
        %v451 = vperm.slane %v342, 7
        %v452 = vlaneseq
        %v453 = vshrl.u32 %v452, 7
        %455 = vset.pattern.permute.xlu0 %v453
        %456 = vperm.xlu0 %455, %v451
        %v457 = vpop.permute.xlu0 %456
        %vm458 = vcmp.eq.s32.totalorder %v352, %v344
        %vm459 = vcmp.eq.s32.totalorder %v352, %v345
        %vm460 = vcmp.eq.s32.totalorder %v359, %v344
        %vm461 = vcmp.eq.s32.totalorder %v359, %v345
        %vm462 = vcmp.eq.s32.totalorder %v366, %v344
        %vm463 = vcmp.eq.s32.totalorder %v366, %v345
        %vm464 = vcmp.eq.s32.totalorder %v373, %v344
        %vm465 = vcmp.eq.s32.totalorder %v373, %v345
        %vm466 = vcmp.eq.s32.totalorder %v380, %v344
        %vm467 = vcmp.eq.s32.totalorder %v380, %v345
        %vm468 = vcmp.eq.s32.totalorder %v387, %v344
        %vm469 = vcmp.eq.s32.totalorder %v387, %v345
        %vm470 = vcmp.eq.s32.totalorder %v394, %v344
        %vm471 = vcmp.eq.s32.totalorder %v394, %v345
        %vm472 = vcmp.eq.s32.totalorder %v401, %v344
        %vm473 = vcmp.eq.s32.totalorder %v401, %v345
        %vm474 = vcmp.eq.s32.totalorder %v408, %v344
        %vm475 = vcmp.eq.s32.totalorder %v408, %v345
        %vm476 = vcmp.eq.s32.totalorder %v415, %v344
        %vm477 = vcmp.eq.s32.totalorder %v415, %v345
        %vm478 = vcmp.eq.s32.totalorder %v422, %v344
        %vm479 = vcmp.eq.s32.totalorder %v422, %v345
        %vm480 = vcmp.eq.s32.totalorder %v429, %v344
        %vm481 = vcmp.eq.s32.totalorder %v429, %v345
        %vm482 = vcmp.eq.s32.totalorder %v436, %v344
        %vm483 = vcmp.eq.s32.totalorder %v436, %v345
        %vm484 = vcmp.eq.s32.totalorder %v443, %v344
        %vm485 = vcmp.eq.s32.totalorder %v443, %v345
        %vm486 = vcmp.eq.s32.totalorder %v450, %v344
        %vm487 = vcmp.eq.s32.totalorder %v450, %v345
        %vm488 = vcmp.eq.s32.totalorder %v457, %v344
        %vm489 = vcmp.eq.s32.totalorder %v457, %v345
        %v490 = vsel %vm458, 1, 0
        %v491 = vsel %vm459, 1, 0
        %v492 = vsel %vm460, 1, 0
        %v493 = vsel %vm461, 1, 0
        %v494 = vsel %vm462, 1, 0
        %v495 = vsel %vm463, 1, 0
        %v496 = vsel %vm464, 1, 0
        %v497 = vsel %vm465, 1, 0
        %v498 = vsel %vm466, 1, 0
        %v499 = vsel %vm467, 1, 0
        %v500 = vsel %vm468, 1, 0
        %v501 = vsel %vm469, 1, 0
        %v502 = vsel %vm470, 1, 0
        %v503 = vsel %vm471, 1, 0
        %v504 = vsel %vm472, 1, 0
        %v505 = vsel %vm473, 1, 0
        %v506 = vsel %vm474, 1, 0
        %v507 = vsel %vm475, 1, 0
        %v508 = vsel %vm476, 1, 0
        %v509 = vsel %vm477, 1, 0
        %v510 = vsel %vm478, 1, 0
        %v511 = vsel %vm479, 1, 0
        %v512 = vsel %vm480, 1, 0
        %v513 = vsel %vm481, 1, 0
        %v514 = vsel %vm482, 1, 0
        %v515 = vsel %vm483, 1, 0
        %v516 = vsel %vm484, 1, 0
        %v517 = vsel %vm485, 1, 0
        %v518 = vsel %vm486, 1, 0
        %v519 = vsel %vm487, 1, 0
        %v520 = vsel %vm488, 1, 0
        %v521 = vsel %vm489, 1, 0
        %v522 = vcvt.s32.f32 %v490
        %v523 = vcvt.s32.f32 %v491
        %v524 = vcvt.s32.f32 %v492
        %v525 = vcvt.s32.f32 %v493
        %v526 = vcvt.s32.f32 %v494
        %v527 = vcvt.s32.f32 %v495
        %v528 = vcvt.s32.f32 %v496
        %v529 = vcvt.s32.f32 %v497
        %v530 = vcvt.s32.f32 %v498
        %v531 = vcvt.s32.f32 %v499
        %v532 = vcvt.s32.f32 %v500
        %v533 = vcvt.s32.f32 %v501
        %v534 = vcvt.s32.f32 %v502
        %v535 = vcvt.s32.f32 %v503
        %v536 = vcvt.s32.f32 %v504
        %v537 = vcvt.s32.f32 %v505
        %v538 = vcvt.s32.f32 %v506
        %v539 = vcvt.s32.f32 %v507
        %v540 = vcvt.s32.f32 %v508
        %v541 = vcvt.s32.f32 %v509
        %v542 = vcvt.s32.f32 %v510
        %v543 = vcvt.s32.f32 %v511
        %v544 = vcvt.s32.f32 %v512
        %v545 = vcvt.s32.f32 %v513
        %v546 = vcvt.s32.f32 %v514
        %v547 = vcvt.s32.f32 %v515
        %v548 = vcvt.s32.f32 %v516
        %v549 = vcvt.s32.f32 %v517
        %v550 = vcvt.s32.f32 %v518
        %v551 = vcvt.s32.f32 %v519
        %v552 = vcvt.s32.f32 %v520
        %v553 = vcvt.s32.f32 %v521
        %v554 = vrot.slane %v522, 4
        %v555 = vadd.f32 %v522, %v554
        %v556 = vrot.slane %v555, 2
        %v557 = vadd.f32 %v555, %v556
        %v558 = vrot.slane %v557, 1
        %v559 = vadd.f32 %v557, %v558
        %v560 = vrot.slane %v523, 4
        %v561 = vadd.f32 %v523, %v560
        %v562 = vrot.slane %v561, 2
        %v563 = vadd.f32 %v561, %v562
        %v564 = vrot.slane %v563, 1
        %v565 = vadd.f32 %v563, %v564
        %v566 = vrot.slane %v524, 4
        %v567 = vadd.f32 %v524, %v566
        %v568 = vrot.slane %v567, 2
        %v569 = vadd.f32 %v567, %v568
        %v570 = vrot.slane %v569, 1
        %v571 = vadd.f32 %v569, %v570
        %v572 = vrot.slane %v525, 4
        %v573 = vadd.f32 %v525, %v572
        %v574 = vrot.slane %v573, 2
        %v575 = vadd.f32 %v573, %v574
        %v576 = vrot.slane %v575, 1
        %v577 = vadd.f32 %v575, %v576
        %v578 = vrot.slane %v526, 4
        %v579 = vadd.f32 %v526, %v578
        %v580 = vrot.slane %v579, 2
        %v581 = vadd.f32 %v579, %v580
        %v582 = vrot.slane %v581, 1
        %v583 = vadd.f32 %v581, %v582
        %v584 = vrot.slane %v527, 4
        %v585 = vadd.f32 %v527, %v584
        %v586 = vrot.slane %v585, 2
        %v587 = vadd.f32 %v585, %v586
        %v588 = vrot.slane %v587, 1
        %v589 = vadd.f32 %v587, %v588
        %v590 = vrot.slane %v528, 4
        %v591 = vadd.f32 %v528, %v590
        %v592 = vrot.slane %v591, 2
        %v593 = vadd.f32 %v591, %v592
        %v594 = vrot.slane %v593, 1
        %v595 = vadd.f32 %v593, %v594
        %v596 = vrot.slane %v529, 4
        %v597 = vadd.f32 %v529, %v596
        %v598 = vrot.slane %v597, 2
        %v599 = vadd.f32 %v597, %v598
        %v600 = vrot.slane %v599, 1
        %v601 = vadd.f32 %v599, %v600
        %v602 = vrot.slane %v530, 4
        %v603 = vadd.f32 %v530, %v602
        %v604 = vrot.slane %v603, 2
        %v605 = vadd.f32 %v603, %v604
        %v606 = vrot.slane %v605, 1
        %v607 = vadd.f32 %v605, %v606
        %v608 = vrot.slane %v531, 4
        %v609 = vadd.f32 %v531, %v608
        %v610 = vrot.slane %v609, 2
        %v611 = vadd.f32 %v609, %v610
        %v612 = vrot.slane %v611, 1
        %v613 = vadd.f32 %v611, %v612
        %v614 = vrot.slane %v532, 4
        %v615 = vadd.f32 %v532, %v614
        %v616 = vrot.slane %v615, 2
        %v617 = vadd.f32 %v615, %v616
        %v618 = vrot.slane %v617, 1
        %v619 = vadd.f32 %v617, %v618
        %v620 = vrot.slane %v533, 4
        %v621 = vadd.f32 %v533, %v620
        %v622 = vrot.slane %v621, 2
        %v623 = vadd.f32 %v621, %v622
        %v624 = vrot.slane %v623, 1
        %v625 = vadd.f32 %v623, %v624
        %v626 = vrot.slane %v534, 4
        %v627 = vadd.f32 %v534, %v626
        %v628 = vrot.slane %v627, 2
        %v629 = vadd.f32 %v627, %v628
        %v630 = vrot.slane %v629, 1
        %v631 = vadd.f32 %v629, %v630
        %v632 = vrot.slane %v535, 4
        %v633 = vadd.f32 %v535, %v632
        %v634 = vrot.slane %v633, 2
        %v635 = vadd.f32 %v633, %v634
        %v636 = vrot.slane %v635, 1
        %v637 = vadd.f32 %v635, %v636
        %v638 = vrot.slane %v536, 4
        %v639 = vadd.f32 %v536, %v638
        %v640 = vrot.slane %v639, 2
        %v641 = vadd.f32 %v639, %v640
        %v642 = vrot.slane %v641, 1
        %v643 = vadd.f32 %v641, %v642
        %v644 = vrot.slane %v537, 4
        %v645 = vadd.f32 %v537, %v644
        %v646 = vrot.slane %v645, 2
        %v647 = vadd.f32 %v645, %v646
        %v648 = vrot.slane %v647, 1
        %v649 = vadd.f32 %v647, %v648
        %v650 = vrot.slane %v538, 4
        %v651 = vadd.f32 %v538, %v650
        %v652 = vrot.slane %v651, 2
        %v653 = vadd.f32 %v651, %v652
        %v654 = vrot.slane %v653, 1
        %v655 = vadd.f32 %v653, %v654
        %v656 = vrot.slane %v539, 4
        %v657 = vadd.f32 %v539, %v656
        %v658 = vrot.slane %v657, 2
        %v659 = vadd.f32 %v657, %v658
        %v660 = vrot.slane %v659, 1
        %v661 = vadd.f32 %v659, %v660
        %v662 = vrot.slane %v540, 4
        %v663 = vadd.f32 %v540, %v662
        %v664 = vrot.slane %v663, 2
        %v665 = vadd.f32 %v663, %v664
        %v666 = vrot.slane %v665, 1
        %v667 = vadd.f32 %v665, %v666
        %v668 = vrot.slane %v541, 4
        %v669 = vadd.f32 %v541, %v668
        %v670 = vrot.slane %v669, 2
        %v671 = vadd.f32 %v669, %v670
        %v672 = vrot.slane %v671, 1
        %v673 = vadd.f32 %v671, %v672
        %v674 = vrot.slane %v542, 4
        %v675 = vadd.f32 %v542, %v674
        %v676 = vrot.slane %v675, 2
        %v677 = vadd.f32 %v675, %v676
        %v678 = vrot.slane %v677, 1
        %v679 = vadd.f32 %v677, %v678
        %v680 = vrot.slane %v543, 4
        %v681 = vadd.f32 %v543, %v680
        %v682 = vrot.slane %v681, 2
        %v683 = vadd.f32 %v681, %v682
        %v684 = vrot.slane %v683, 1
        %v685 = vadd.f32 %v683, %v684
        %v686 = vrot.slane %v544, 4
        %v687 = vadd.f32 %v544, %v686
        %v688 = vrot.slane %v687, 2
        %v689 = vadd.f32 %v687, %v688
        %v690 = vrot.slane %v689, 1
        %v691 = vadd.f32 %v689, %v690
        %v692 = vrot.slane %v545, 4
        %v693 = vadd.f32 %v545, %v692
        %v694 = vrot.slane %v693, 2
        %v695 = vadd.f32 %v693, %v694
        %v696 = vrot.slane %v695, 1
        %v697 = vadd.f32 %v695, %v696
        %v698 = vrot.slane %v546, 4
        %v699 = vadd.f32 %v546, %v698
        %v700 = vrot.slane %v699, 2
        %v701 = vadd.f32 %v699, %v700
        %v702 = vrot.slane %v701, 1
        %v703 = vadd.f32 %v701, %v702
        %v704 = vrot.slane %v547, 4
        %v705 = vadd.f32 %v547, %v704
        %v706 = vrot.slane %v705, 2
        %v707 = vadd.f32 %v705, %v706
        %v708 = vrot.slane %v707, 1
        %v709 = vadd.f32 %v707, %v708
        %v710 = vrot.slane %v548, 4
        %v711 = vadd.f32 %v548, %v710
        %v712 = vrot.slane %v711, 2
        %v713 = vadd.f32 %v711, %v712
        %v714 = vrot.slane %v713, 1
        %v715 = vadd.f32 %v713, %v714
        %v716 = vrot.slane %v549, 4
        %v717 = vadd.f32 %v549, %v716
        %v718 = vrot.slane %v717, 2
        %v719 = vadd.f32 %v717, %v718
        %v720 = vrot.slane %v719, 1
        %v721 = vadd.f32 %v719, %v720
        %v722 = vrot.slane %v550, 4
        %v723 = vadd.f32 %v550, %v722
        %v724 = vrot.slane %v723, 2
        %v725 = vadd.f32 %v723, %v724
        %v726 = vrot.slane %v725, 1
        %v727 = vadd.f32 %v725, %v726
        %v728 = vrot.slane %v551, 4
        %v729 = vadd.f32 %v551, %v728
        %v730 = vrot.slane %v729, 2
        %v731 = vadd.f32 %v729, %v730
        %v732 = vrot.slane %v731, 1
        %v733 = vadd.f32 %v731, %v732
        %v734 = vrot.slane %v552, 4
        %v735 = vadd.f32 %v552, %v734
        %v736 = vrot.slane %v735, 2
        %v737 = vadd.f32 %v735, %v736
        %v738 = vrot.slane %v737, 1
        %v739 = vadd.f32 %v737, %v738
        %v740 = vrot.slane %v553, 4
        %v741 = vadd.f32 %v553, %v740
        %v742 = vrot.slane %v741, 2
        %v743 = vadd.f32 %v741, %v742
        %v744 = vrot.slane %v743, 1
        %v745 = vadd.f32 %v743, %v744
        %v746 = vpack.c.bf16 %v559, %v559
        %v747 = vpack.c.bf16 %v565, %v565
        %v748 = vpack.c.bf16 %v571, %v571
        %v749 = vpack.c.bf16 %v577, %v577
        %v750 = vpack.c.bf16 %v583, %v583
        %v751 = vpack.c.bf16 %v589, %v589
        %v752 = vpack.c.bf16 %v595, %v595
        %v753 = vpack.c.bf16 %v601, %v601
        %v754 = vpack.c.bf16 %v607, %v607
        %v755 = vpack.c.bf16 %v613, %v613
        %v756 = vpack.c.bf16 %v619, %v619
        %v757 = vpack.c.bf16 %v625, %v625
        %v758 = vpack.c.bf16 %v631, %v631
        %v759 = vpack.c.bf16 %v637, %v637
        %v760 = vpack.c.bf16 %v643, %v643
        %v761 = vpack.c.bf16 %v649, %v649
        %v762 = vpack.c.bf16 %v655, %v655
        %v763 = vpack.c.bf16 %v661, %v661
        %v764 = vpack.c.bf16 %v667, %v667
        %v765 = vpack.c.bf16 %v673, %v673
        %v766 = vpack.c.bf16 %v679, %v679
        %v767 = vpack.c.bf16 %v685, %v685
        %v768 = vpack.c.bf16 %v691, %v691
        %v769 = vpack.c.bf16 %v697, %v697
        %v770 = vpack.c.bf16 %v703, %v703
        %v771 = vpack.c.bf16 %v709, %v709
        %v772 = vpack.c.bf16 %v715, %v715
        %v773 = vpack.c.bf16 %v721, %v721
        %v774 = vpack.c.bf16 %v727, %v727
        %v775 = vpack.c.bf16 %v733, %v733
        %v776 = vpack.c.bf16 %v739, %v739
        %v777 = vpack.c.bf16 %v745, %v745
        %v778 = vld [vmem:[#allocation2] sm:$0xf]
        %v779 = vld [vmem:[#allocation2 + $0x4] sm:$0xf]
        %v780 = vld [vmem:[#allocation2 + $0x8] sm:$0xf]
        %v781 = vld [vmem:[#allocation2 + $0xc] sm:$0xf]
        %v782 = vld [vmem:[#allocation2 + $0x10] sm:$0xf]
        %v783 = vld [vmem:[#allocation2 + $0x14] sm:$0xf]
        %v784 = vld [vmem:[#allocation2 + $0x18] sm:$0xf]
        %v785 = vld [vmem:[#allocation2 + $0x1c] sm:$0xf]
        %v786 = vld [vmem:[#allocation2 + $0x20] sm:$0xf]
        %v787 = vld [vmem:[#allocation2 + $0x24] sm:$0xf]
        %v788 = vld [vmem:[#allocation2 + $0x28] sm:$0xf]
        %v789 = vld [vmem:[#allocation2 + $0x2c] sm:$0xf]
        %v790 = vld [vmem:[#allocation2 + $0x30] sm:$0xf]
        %v791 = vld [vmem:[#allocation2 + $0x34] sm:$0xf]
        %v792 = vld [vmem:[#allocation2 + $0x38] sm:$0xf]
        %v793 = vld [vmem:[#allocation2 + $0x3c] sm:$0xf]
        %v794 = vld [vmem:[#allocation2 + $0x40] sm:$0xf]
        %v795 = vld [vmem:[#allocation2 + $0x44] sm:$0xf]
        %v796 = vld [vmem:[#allocation2 + $0x48] sm:$0xf]
        %v797 = vld [vmem:[#allocation2 + $0x4c] sm:$0xf]
        %v798 = vld [vmem:[#allocation2 + $0x50] sm:$0xf]
        %v799 = vld [vmem:[#allocation2 + $0x54] sm:$0xf]
        %v800 = vld [vmem:[#allocation2 + $0x58] sm:$0xf]
        %v801 = vld [vmem:[#allocation2 + $0x5c] sm:$0xf]
        %v802 = vld [vmem:[#allocation2 + $0x60] sm:$0xf]
        %v803 = vld [vmem:[#allocation2 + $0x64] sm:$0xf]
        %v804 = vld [vmem:[#allocation2 + $0x68] sm:$0xf]
        %v805 = vld [vmem:[#allocation2 + $0x6c] sm:$0xf]
        %v806 = vld [vmem:[#allocation2 + $0x70] sm:$0xf]
        %v807 = vld [vmem:[#allocation2 + $0x74] sm:$0xf]
        %v808 = vld [vmem:[#allocation2 + $0x78] sm:$0xf]
        %v809 = vld [vmem:[#allocation2 + $0x7c] sm:$0xf]
        %v842 = vunpack.c.l.b16 %v746
        %v843 = vunpack.c.l.b16 %v747
        %v844 = vunpack.c.l.b16 %v748
        %v845 = vunpack.c.l.b16 %v749
        %v846 = vunpack.c.l.b16 %v750
        %v847 = vunpack.c.l.b16 %v751
        %v848 = vunpack.c.l.b16 %v752
        %v849 = vunpack.c.l.b16 %v753
        %v850 = vunpack.c.l.b16 %v754
        %v851 = vunpack.c.l.b16 %v755
        %v852 = vunpack.c.l.b16 %v756
        %v853 = vunpack.c.l.b16 %v757
        %v854 = vunpack.c.l.b16 %v758
        %v855 = vunpack.c.l.b16 %v759
        %v856 = vunpack.c.l.b16 %v760
        %v857 = vunpack.c.l.b16 %v761
        %v858 = vunpack.c.l.b16 %v762
        %v859 = vunpack.c.l.b16 %v763
        %v860 = vunpack.c.l.b16 %v764
        %v861 = vunpack.c.l.b16 %v765
        %v862 = vunpack.c.l.b16 %v766
        %v863 = vunpack.c.l.b16 %v767
        %v864 = vunpack.c.l.b16 %v768
        %v865 = vunpack.c.l.b16 %v769
        %v866 = vunpack.c.l.b16 %v770
        %v867 = vunpack.c.l.b16 %v771
        %v868 = vunpack.c.l.b16 %v772
        %v869 = vunpack.c.l.b16 %v773
        %v870 = vunpack.c.l.b16 %v774
        %v871 = vunpack.c.l.b16 %v775
        %v872 = vunpack.c.l.b16 %v776
        %v873 = vunpack.c.l.b16 %v777
        %vm874 = vcmask 1041409
        %v875 = vsel %vm874, %v844, %v842
        %vm876 = vcmask 1042434
        %v877 = vsel %vm876, %v846, %v875
        %vm878 = vcmask 1043459
        %v879 = vsel %vm878, %v848, %v877
        %vm880 = vcmask 1044484
        %v881 = vsel %vm880, %v850, %v879
        %vm882 = vcmask 1045509
        %v883 = vsel %vm882, %v852, %v881
        %vm884 = vcmask 1046534
        %v885 = vsel %vm884, %v854, %v883
        %vm886 = vcmask 1047559
        %v887 = vsel %vm886, %v856, %v885
        %v888 = vsel %vm874, %v845, %v843
        %v889 = vsel %vm876, %v847, %v888
        %v890 = vsel %vm878, %v849, %v889
        %v891 = vsel %vm880, %v851, %v890
        %v892 = vsel %vm882, %v853, %v891
        %v893 = vsel %vm884, %v855, %v892
        %v894 = vsel %vm886, %v857, %v893
        %v895 = vsel %vm874, %v860, %v858
        %v896 = vsel %vm876, %v862, %v895
        %v897 = vsel %vm878, %v864, %v896
        %v898 = vsel %vm880, %v866, %v897
        %v899 = vsel %vm882, %v868, %v898
        %v900 = vsel %vm884, %v870, %v899
        %v901 = vsel %vm886, %v872, %v900
        %v902 = vsel %vm874, %v861, %v859
        %v903 = vsel %vm876, %v863, %v902
        %v904 = vsel %vm878, %v865, %v903
        %v905 = vsel %vm880, %v867, %v904
        %v906 = vsel %vm882, %v869, %v905
        %v907 = vsel %vm884, %v871, %v906
        %v908 = vsel %vm886, %v873, %v907
        %v909 = vpack.c.b16 %v901, %v887
        %v910 = vpack.c.b16 %v908, %v894
        %v945 = vunpack.c.l.b16 %v778
        %v946 = vunpack.c.l.b16 %v779
        %v947 = vunpack.c.l.b16 %v780
        %v948 = vunpack.c.l.b16 %v781
        %v949 = vunpack.c.l.b16 %v782
        %v950 = vunpack.c.l.b16 %v783
        %v951 = vunpack.c.l.b16 %v784
        %v952 = vunpack.c.l.b16 %v785
        %v953 = vunpack.c.l.b16 %v786
        %v954 = vunpack.c.l.b16 %v787
        %v955 = vunpack.c.l.b16 %v788
        %v956 = vunpack.c.l.b16 %v789
        %v957 = vunpack.c.l.b16 %v790
        %v958 = vunpack.c.l.b16 %v791
        %v959 = vunpack.c.l.b16 %v792
        %v960 = vunpack.c.l.b16 %v793
        %v961 = vunpack.c.l.b16 %v794
        %v962 = vunpack.c.l.b16 %v795
        %v963 = vunpack.c.l.b16 %v796
        %v964 = vunpack.c.l.b16 %v797
        %v965 = vunpack.c.l.b16 %v798
        %v966 = vunpack.c.l.b16 %v799
        %v967 = vunpack.c.l.b16 %v800
        %v968 = vunpack.c.l.b16 %v801
        %v969 = vunpack.c.l.b16 %v802
        %v970 = vunpack.c.l.b16 %v803
        %v971 = vunpack.c.l.b16 %v804
        %v972 = vunpack.c.l.b16 %v805
        %v973 = vunpack.c.l.b16 %v806
        %v974 = vunpack.c.l.b16 %v807
        %v975 = vunpack.c.l.b16 %v808
        %v976 = vunpack.c.l.b16 %v809
        %v977 = vpack.c.b16 %v946, %v945
        %v978 = vpack.c.b16 %v948, %v947
        %v979 = vpack.c.b16 %v950, %v949
        %v980 = vpack.c.b16 %v952, %v951
        %v981 = vpack.c.b16 %v954, %v953
        %v982 = vpack.c.b16 %v956, %v955
        %v983 = vpack.c.b16 %v958, %v957
        %v984 = vpack.c.b16 %v960, %v959
        %v985 = vpack.c.b16 %v962, %v961
        %v986 = vpack.c.b16 %v964, %v963
        %v987 = vpack.c.b16 %v966, %v965
        %v988 = vpack.c.b16 %v968, %v967
        %v989 = vpack.c.b16 %v970, %v969
        %v990 = vpack.c.b16 %v972, %v971
        %v991 = vpack.c.b16 %v974, %v973
        %v992 = vpack.c.b16 %v976, %v975
        %1009 = vmatpush.bf16.msra.mxu0 %v984
        %1010 = vmatpush.bf16.msra.mxu0 %v983
        %1011 = vmatpush.bf16.msra.mxu0 %v982
        %1012 = vmatpush.bf16.msra.mxu0 %v981
        %1013 = vmatpush.bf16.msra.mxu0 %v980
        %1014 = vmatpush.bf16.msra.mxu0 %v979
        %1015 = vmatpush.bf16.msra.mxu0 %v978
        %1016 = vmatpush.bf16.msra.mxu0 %v977
        %1017 = vmatmul.bf16.gmra.mxu0 %v909
        %v1018 = vpop.f32.mrf.mxu0
        %v1019 = vadd.f32 0.0, %v1018
        %v1020 = vpop.f32.mrf.mxu0
        %v1021 = vadd.f32 0.0, %v1020
        %1022 = vdwg.mxu0
        %1023 = vmatpush.bf16.msra.mxu0 %v992
        %1024 = vmatpush.bf16.msra.mxu0 %v991
        %1025 = vmatpush.bf16.msra.mxu0 %v990
        %1026 = vmatpush.bf16.msra.mxu0 %v989
        %1027 = vmatpush.bf16.msra.mxu0 %v988
        %1028 = vmatpush.bf16.msra.mxu0 %v987
        %1029 = vmatpush.bf16.msra.mxu0 %v986
        %1030 = vmatpush.bf16.msra.mxu0 %v985
        %1031 = vmatmul.bf16.gmra.mxu0 %v910
        %v1032 = vpop.f32.mrf.mxu0
        %v1033 = vadd.f32 %v1019, %v1032
        %v1034 = vpop.f32.mrf.mxu0
        %v1035 = vadd.f32 %v1021, %v1034
        %1036 = vdwg.mxu0
        %v1037 = vpack.c.bf16 %v1035, %v1033
        %v1038 = vld [vmem:[#allocation5] sm:$0xf]
        %v1039 = vld [vmem:[#allocation5 + $0x4] sm:$0xf]
        %v1040 = vld [vmem:[#allocation5 + $0x8] sm:$0xf]
        %v1041 = vld [vmem:[#allocation5 + $0xc] sm:$0xf]
        %v1042 = vld [vmem:[#allocation5 + $0x10] sm:$0xf]
        %v1043 = vld [vmem:[#allocation5 + $0x14] sm:$0xf]
        %v1044 = vld [vmem:[#allocation5 + $0x18] sm:$0xf]
        %v1045 = vld [vmem:[#allocation5 + $0x1c] sm:$0xf]
        %v1046 = vld [vmem:[#allocation5 + $0x20] sm:$0xf]
        %v1047 = vld [vmem:[#allocation5 + $0x24] sm:$0xf]
        %v1048 = vld [vmem:[#allocation5 + $0x28] sm:$0xf]
        %v1049 = vld [vmem:[#allocation5 + $0x2c] sm:$0xf]
        %v1050 = vld [vmem:[#allocation5 + $0x30] sm:$0xf]
        %v1051 = vld [vmem:[#allocation5 + $0x34] sm:$0xf]
        %v1052 = vld [vmem:[#allocation5 + $0x38] sm:$0xf]
        %v1053 = vld [vmem:[#allocation5 + $0x3c] sm:$0xf]
        %v1054 = vld [vmem:[%s4] sm:$0x1]
        %v1055 = vunpack.c.l.bf16 %v1054
        %v1056 = vperm.slane %v1055, 0
        %v1073 = vunpack.c.l.b16 %v1038
        %v1074 = vunpack.c.l.b16 %v1039
        %v1075 = vunpack.c.l.b16 %v1040
        %v1076 = vunpack.c.l.b16 %v1041
        %v1077 = vunpack.c.l.b16 %v1042
        %v1078 = vunpack.c.l.b16 %v1043
        %v1079 = vunpack.c.l.b16 %v1044
        %v1080 = vunpack.c.l.b16 %v1045
        %v1081 = vunpack.c.l.b16 %v1046
        %v1082 = vunpack.c.l.b16 %v1047
        %v1083 = vunpack.c.l.b16 %v1048
        %v1084 = vunpack.c.l.b16 %v1049
        %v1085 = vunpack.c.l.b16 %v1050
        %v1086 = vunpack.c.l.b16 %v1051
        %v1087 = vunpack.c.l.b16 %v1052
        %v1088 = vunpack.c.l.b16 %v1053
        %v1089 = vpack.c.b16 %v1074, %v1073
        %v1090 = vpack.c.b16 %v1076, %v1075
        %v1091 = vpack.c.b16 %v1078, %v1077
        %v1092 = vpack.c.b16 %v1080, %v1079
        %v1093 = vpack.c.b16 %v1082, %v1081
        %v1094 = vpack.c.b16 %v1084, %v1083
        %v1095 = vpack.c.b16 %v1086, %v1085
        %v1096 = vpack.c.b16 %v1088, %v1087
        %1105 = vmatpush.bf16.msra.mxu0 %v1096
        %1106 = vmatpush.bf16.msra.mxu0 %v1095
        %1107 = vmatpush.bf16.msra.mxu0 %v1094
        %1108 = vmatpush.bf16.msra.mxu0 %v1093
        %1109 = vmatpush.bf16.msra.mxu0 %v1092
        %1110 = vmatpush.bf16.msra.mxu0 %v1091
        %1111 = vmatpush.bf16.msra.mxu0 %v1090
        %1112 = vmatpush.bf16.msra.mxu0 %v1089
        %1113 = vmatmul.bf16.gmra.mxu0 %v1037
        %v1114 = vpop.f32.mrf.mxu0
        %v1115 = vadd.f32 %v1056, %v1114
        %v1116 = vpop.f32.mrf.mxu0
        %v1117 = vadd.f32 %v1056, %v1116
        %1118 = vdwg.mxu0
        %v1119 = vtanh.pop %v1115
        %v1120 = vtanh.pop %v1117
        %v1121 = vadd.f32 %v1119, %v1120
        %v1122 = vpack.c.bf16 %v1121, %v1121
        %v1123 = vld [vmem:[#allocation7] sm:$0xf]
        %v1124 = vld [vmem:[#allocation7 + $0x4] sm:$0xf]
        %v1125 = vld [vmem:[#allocation7 + $0x8] sm:$0xf]
        %v1126 = vld [vmem:[#allocation7 + $0xc] sm:$0xf]
        %v1127 = vld [vmem:[#allocation7 + $0x10] sm:$0xf]
        %v1128 = vld [vmem:[#allocation7 + $0x14] sm:$0xf]
        %v1129 = vld [vmem:[#allocation7 + $0x18] sm:$0xf]
        %v1130 = vld [vmem:[#allocation7 + $0x1c] sm:$0xf]
        %v1131 = vld [vmem:[#allocation7 + $0x20] sm:$0xf]
        %v1132 = vld [vmem:[#allocation7 + $0x24] sm:$0xf]
        %v1133 = vld [vmem:[#allocation7 + $0x28] sm:$0xf]
        %v1134 = vld [vmem:[#allocation7 + $0x2c] sm:$0xf]
        %v1135 = vld [vmem:[#allocation7 + $0x30] sm:$0xf]
        %v1136 = vld [vmem:[#allocation7 + $0x34] sm:$0xf]
        %v1137 = vld [vmem:[#allocation7 + $0x38] sm:$0xf]
        %v1138 = vld [vmem:[#allocation7 + $0x3c] sm:$0xf]
        %v1139 = vld [vmem:[%s6] sm:$0x1]
        %v1140 = vunpack.c.l.bf16 %v1139
        %v1141 = vperm.slane %v1140, 0
        %v1158 = vunpack.c.l.b16 %v1123
        %v1159 = vunpack.c.l.b16 %v1124
        %v1160 = vunpack.c.l.b16 %v1125
        %v1161 = vunpack.c.l.b16 %v1126
        %v1162 = vunpack.c.l.b16 %v1127
        %v1163 = vunpack.c.l.b16 %v1128
        %v1164 = vunpack.c.l.b16 %v1129
        %v1165 = vunpack.c.l.b16 %v1130
        %v1166 = vunpack.c.l.b16 %v1131
        %v1167 = vunpack.c.l.b16 %v1132
        %v1168 = vunpack.c.l.b16 %v1133
        %v1169 = vunpack.c.l.b16 %v1134
        %v1170 = vunpack.c.l.b16 %v1135
        %v1171 = vunpack.c.l.b16 %v1136
        %v1172 = vunpack.c.l.b16 %v1137
        %v1173 = vunpack.c.l.b16 %v1138
        %v1174 = vpack.c.b16 %v1159, %v1158
        %v1175 = vpack.c.b16 %v1161, %v1160
        %v1176 = vpack.c.b16 %v1163, %v1162
        %v1177 = vpack.c.b16 %v1165, %v1164
        %v1178 = vpack.c.b16 %v1167, %v1166
        %v1179 = vpack.c.b16 %v1169, %v1168
        %v1180 = vpack.c.b16 %v1171, %v1170
        %v1181 = vpack.c.b16 %v1173, %v1172
        %1190 = vmatpush.bf16.msra.mxu0 %v1181
        %1191 = vmatpush.bf16.msra.mxu0 %v1180
        %1192 = vmatpush.bf16.msra.mxu0 %v1179
        %1193 = vmatpush.bf16.msra.mxu0 %v1178
        %1194 = vmatpush.bf16.msra.mxu0 %v1177
        %1195 = vmatpush.bf16.msra.mxu0 %v1176
        %1196 = vmatpush.bf16.msra.mxu0 %v1175
        %1197 = vmatpush.bf16.msra.mxu0 %v1174
        %1198 = vmatmul.bf16.gmra.mxu0 %v1122
        %v1199 = vpop.f32.mrf.mxu0
        %v1200 = vadd.f32 %v1141, %v1199
        %v1201 = vpop.f32.mrf.mxu0
        %1202 = vdwg.mxu0
        %vm1203 = vcmp.lt.s32.totalorder %v344, 2
        %v1204 = vsel %vm1203, %v1200, -1e+30
        %1205 = vmax.xlane.f32.xlu0 %v1204
        %v1206 = vpop.xlane.xlu0 %1205
        %v1207 = vsub.f32 %v1204, %v1206
        %v1208 = vmul.f32 %v1207, 1.442695
        %v1209 = vpow.pop %v1208
        %1210 = vadd.xlane.f32.xlu0 %v1209
        %v1211 = vpop.xlane.xlu0 %1210
        %v1212 = vrcp.pop %v1211
        %v1213 = vmul.f32 %v1209, %v1212
        %1214 = vst [vmem:[%s332] sm:$0xff] %v1213
        %s1215 = sand.u32 %s188, 1
        %s1216 = scalar_lea.sflag [#allocation4], %s1215
        %s1217 = sand.u32 %s188, 1
        %s1218 = smul.addr %s1217, 8
        %s1219 = scalar_lea.vmem [#allocation8], %s1218
        // Predicated region
        $region61: #{tpu_custom_call.1} parent=47 // pred_check
          %p1220 = pneg %p198
        $region62: #{tpu_custom_call.1} parent=47 // pred_check_branch
          %1222 = sbr.rel (%p1220) target = $region64
        $region63: #{tpu_custom_call.1} parent=47 // pred_region
          %1224 = vsyncadd %s1216, 0
          %s1225 = smul.addr %s23, 8
          %s1226 = scalar_lea.hbm %s7, %s1225
          %s1228 = sshll.u32 %s1219, 4
          %s1229 = int_to_ptr.vmem [resolvable:$true] %s1228
          %s1230 = sshll.u32 %s1226, 4
          %s1231 = int_to_ptr.hbm [resolvable:$true] %s1230
          %1233 = dma.vmem_to_hbm [thread:$0]  %s1229, 128, %s1231, %s1216
        $region64: #{tpu_custom_call.1} parent=47 // pred_fallthru
          _
      $region48: #{tpu_custom_call.1} parent=5 // pred_fallthru
        _
      %p1234 = scmp.le.s32.totalorder 2, %s18
      // Predicated region
      $region65: #{tpu_custom_call.1} parent=5 // pred_check
        %p1235 = pneg %p1234
      $region66: #{tpu_custom_call.1} parent=5 // pred_check_branch
        %1237 = sbr.rel (%p1235) target = $region68
      $region67: #{tpu_custom_call.1} parent=5 // pred_region
        %s1238 = ssub.s32 %s18, 2
        // Predicated region
        $region69: #{tpu_custom_call.1} parent=67 // pred_check
          %p1239 = pneg %p204
        $region70: #{tpu_custom_call.1} parent=67 // pred_check_branch
          %1241 = sbr.rel (%p1239) target = $region72
        $region71: #{tpu_custom_call.1} parent=67 // pred_region
          %s1242 = sand.u32 %s189, 1
          %s1243 = scalar_lea.sflag [#allocation4], %s1242
          %s1244 = sand.u32 %s189, 1
          %s1245 = smul.addr %s1244, 8
          %s1246 = scalar_lea.vmem [#allocation8], %s1245
          %1248 = dma.done %s1243, 128
        $region72: #{tpu_custom_call.1} parent=67 // pred_fallthru
          _
      $region68: #{tpu_custom_call.1} parent=5 // pred_fallthru
        _
    $region6: #{tpu_custom_call.1} parent=1 // loop_footer
      %s22 = sadd.s32 1, %s18
    $region7: #{tpu_custom_call.1} parent=1 // loop_footer_branch
      %17 = sbr.rel target = $region3
    $region8: #{tpu_custom_call.1} parent=1 // loop_exit
      _
    %1249 = vsyncpa [#allocation3], 1
    %s1250 = scalar_lea.sflag [#allocation3], 1
    %1251 = vsyncpa %s1250, 1
    %1252 = vsyncpa [#allocation6], 1
    %1253 = vsyncpa [#allocation4], 1
    %s1254 = scalar_lea.sflag [#allocation4], 1
    %1255 = vsyncpa %s1254, 1

</llo_original>
